<compile_context>
chip_gen: v6e
topology: v6e:2x2x1
jax: 0.10.0
libtpu: 0.0.40
codegen_flags: <defaults>
</compile_context>

<pallas_src>
import math

import jax
import jax.numpy as jnp
from jax.experimental import pallas as pl
from jax.experimental.pallas import tpu as pltpu


def _round_up(v: int, m: int) -> int:
    return (v + m - 1) // m * m


def _sublane(dtype) -> int:
    # sub-32-bit dtypes pack along sublanes: 8 rows (f32), 16 (bf16), 32 (int8)
    return {4: 8, 2: 16, 1: 32}.get(jnp.dtype(dtype).itemsize, 8)


_VMEM_BUDGET = 12 * 1024 * 1024  # headroom under v5e's 16 MiB scoped-VMEM default


# ---------------------------------------------------------------------------
# Kernels
# ---------------------------------------------------------------------------
def _resident_linear_kernel(x_ref, w_ref, b_ref, o_ref):
    """Weight/bias fully VMEM-resident; one output row-block per grid step."""
    o_ref[...] = (
        jnp.dot(x_ref[...], w_ref[...], preferred_element_type=jnp.float32)
        + b_ref[...].astype(jnp.float32)
    ).astype(o_ref.dtype)


def _tiled_linear_kernel(x_ref, w_ref, b_ref, o_ref, acc_ref):
    """Fallback: (tm, tn) output tile with K as the (last) reduction grid axis."""
    k = pl.program_id(2)

    @pl.when(k == 0)
    def _():
        acc_ref[...] = jnp.zeros_like(acc_ref)

    acc_ref[...] += jnp.dot(
        x_ref[...], w_ref[...], preferred_element_type=jnp.float32
    )

    @pl.when(k == pl.num_programs(2) - 1)
    def _():
        o_ref[...] = (acc_ref[...] + b_ref[...].astype(jnp.float32)).astype(o_ref.dtype)


# ---------------------------------------------------------------------------
# One-time parameter preparation (hoisted out of the per-call path)
# ---------------------------------------------------------------------------
def prepare_unpatchify_params(weight, bias):
    """Transpose nn.Linear weight to (nf, window) and pad the lane dim to 128 once."""
    window_size, nf = weight.shape
    n_pad = _round_up(window_size, 128)
    w_t = weight.T                              # (nf, window_size)
    b2 = bias.reshape(1, window_size)
    if n_pad != window_size:
        w_t = jnp.pad(w_t, ((0, 0), (0, n_pad - window_size)))
        b2 = jnp.pad(b2, ((0, 0), (0, n_pad - window_size)))
    return w_t, b2, window_size


# ---------------------------------------------------------------------------
# Forward
# ---------------------------------------------------------------------------
def unpatchify1d_per_feature_prepared(x, w_t, b2, window_size):
    """x: (..., P, L) with P*L == w_t.shape[0]; returns (..., window_size)."""
    *lead, P, L = x.shape
    nf = P * L
    K, Np = w_t.shape
    assert K == nf, f"Linear in_features {K} != flattened size {nf}"

    # Flatten(start_dim=-2) + collapse leading dims (free wrapper-side reshape).
    x2 = x.reshape(-1, nf)
    M = x2.shape[0]

    x_isz = jnp.dtype(x2.dtype).itemsize
    w_isz = jnp.dtype(w_t.dtype).itemsize
    b_isz = jnp.dtype(b2.dtype).itemsize
    o_isz = x_isz
    sub = _sublane(x2.dtype)

    # VMEM needed to keep weight + bias resident (count 2x for buffering slack).
    resident_bytes = 2 * K * Np * w_isz + 2 * Np * b_isz

    if resident_bytes <= _VMEM_BUDGET // 2:
        # ------------------ primary path: 1-D grid over M ------------------
        tm = min(_round_up(M, sub), 1024)
        while tm > sub and resident_bytes + 2 * tm * (K * x_isz + Np * o_isz) > _VMEM_BUDGET:
            tm = max(sub, tm // 2)
        # Give v7x megacore >=2 parallel steps when M is big enough to amortize
        # the ~0.35 us per-step overhead.
        if M >= 2 * sub and pl.cdiv(M, tm) < 2:
            tm = _round_up(pl.cdiv(M, 2), sub)

        grid = (pl.cdiv(M, tm),)
        cost = pl.CostEstimate(
            flops=2 * M * K * Np,
            transcendentals=0,
            bytes_accessed=M * K * x_isz + K * Np * w_isz + Np * b_isz + M * Np * o_isz,
        )
        out = pl.pallas_call(
            _resident_linear_kernel,
            out_shape=jax.ShapeDtypeStruct((M, Np), x.dtype),
            grid_spec=pltpu.PrefetchScalarGridSpec(
                num_scalar_prefetch=0,
                grid=grid,
                in_specs=[
                    pl.BlockSpec((tm, K), lambda i: (i, 0)),   # streamed activations
                    pl.BlockSpec((K, Np), lambda i: (0, 0)),   # resident weight
                    pl.BlockSpec((1, Np), lambda i: (0, 0)),   # resident bias
                ],
                out_specs=pl.BlockSpec((tm, Np), lambda i: (i, 0)),
            ),
            compiler_params=pltpu.CompilerParams(
                dimension_semantics=("parallel",),
                vmem_limit_bytes=32 * 1024 * 1024,
            ),
            cost_estimate=cost,
        )(x2, w_t, b2)
    else:
        # ---------------- fallback: 3-D (M, N, K) tiled matmul -------------
        tm = min(_round_up(M, sub), 256)
        tk = min(_round_up(K, 128), 512)
        tn = min(_round_up(Np, 128), 512)
        Kp, Npp = _round_up(K, tk), _round_up(Np, tn)
        x2p = jnp.pad(x2, ((0, 0), (0, Kp - K))) if Kp != K else x2
        w_tp = jnp.pad(w_t, ((0, Kp - K), (0, Npp - Np))) if (Kp, Npp) != (K, Np) else w_t
        b2p = jnp.pad(b2, ((0, 0), (0, Npp - Np))) if Npp != Np else b2

        grid = (pl.cdiv(M, tm), Npp // tn, Kp // tk)
        out = pl.pallas_call(
            _tiled_linear_kernel,
            out_shape=jax.ShapeDtypeStruct((M, Npp), x.dtype),
            grid_spec=pltpu.PrefetchScalarGridSpec(
                num_scalar_prefetch=0,
                grid=grid,
                in_specs=[
                    pl.BlockSpec((tm, tk), lambda i, j, k: (i, k)),
                    pl.BlockSpec((tk, tn), lambda i, j, k: (k, j)),
                    pl.BlockSpec((1, tn), lambda i, j, k: (0, j)),
                ],
                out_specs=pl.BlockSpec((tm, tn), lambda i, j, k: (i, j)),
                scratch_shapes=[pltpu.VMEM((tm, tn), jnp.float32)],
            ),
            compiler_params=pltpu.CompilerParams(
                dimension_semantics=("parallel", "parallel", "arbitrary"),
                vmem_limit_bytes=32 * 1024 * 1024,
            ),
        )(x2p, w_tp, b2p)

    if out.shape[1] != window_size:
        out = out[:, :window_size]

    # TODO(synk): nn.Dropout train-mode stochastic masking omitted
    # (eval / dropout=0.0 default -> identity).
    return out.reshape(*lead, window_size)


def unpatchify1d_per_feature(x, weight, bias):
    """Convenience wrapper (prepares params on every call; prefer preparing once)."""
    w_t, b2, window_size = prepare_unpatchify_params(weight, bias)
    return unpatchify1d_per_feature_prepared(x, w_t, b2, window_size)


if __name__ == "__main__":
    # Small shapes consistent with the module: batch=2, features=4,
    # patches=8, patch_len=16  ->  nf = 128, window_size = 256.
    B, C, P, L = 2, 4, 8, 16
    nf = P * L
    window_size = 256

    key = jax.random.PRNGKey(0)
    kx, kw, kb = jax.random.split(key, 3)
    x = jax.random.normal(kx, (B, C, P, L), dtype=jnp.float32)

    # Deterministic Linear params (kaiming-uniform-like bounds, as in nn.Linear).
    bound = 1.0 / math.sqrt(nf)
    weight = jax.random.uniform(
        kw, (window_size, nf), minval=-bound, maxval=bound, dtype=jnp.float32
    )
    bias = jax.random.uniform(
        kb, (window_size,), minval=-bound, maxval=bound, dtype=jnp.float32
    )

    # Prepare parameters ONCE (transpose + lane-padding hoisted out of the forward).
    w_t, b2, ws = prepare_unpatchify_params(weight, bias)
    y = unpatchify1d_per_feature_prepared(x, w_t, b2, ws)
    jax.block_until_ready(y)

    # Plain-JAX reference: flatten(-2) -> x @ W.T + b (dropout is identity in eval).
    ref = x.reshape(B, C, nf) @ weight.T + bias
    assert y.shape == (B, C, window_size), y.shape
    assert jnp.allclose(y, ref, atol=1e-4, rtol=1e-4)

    print("KERNEL_OK")
</pallas_src>

<mosaic_0001>
module attributes {stable_mosaic.version = 11 : i64} {
  func.func @_resident_linear_kernel(%arg0: i32, %arg1: memref<8x128xf32, #tpu.memory_space<vmem>>, %arg2: memref<128x256xf32, #tpu.memory_space<vmem>>, %arg3: memref<1x256xf32, #tpu.memory_space<vmem>>, %arg4: memref<8x256xf32, #tpu.memory_space<vmem>>) attributes {dimension_semantics = [#tpu.dimension_semantics<parallel>], iteration_bounds = array<i64: 1>, scalar_prefetch = 0 : i64, scratch_operands = 0 : i64, tpu.core_type = #tpu.core_type<tc>, window_params = [{transform_indices = @transform_0, window_bounds = array<i64: 8, 128>}, {pipeline_mode = #tpu.pipeline_mode<synchronous>, transform_indices = @transform_1, window_bounds = array<i64: 128, 256>}, {pipeline_mode = #tpu.pipeline_mode<synchronous>, transform_indices = @transform_2, window_bounds = array<i64: 1, 256>}, {transform_indices = @transform_3, window_bounds = array<i64: 8, 256>}]} {
    %c0 = arith.constant 0 : index
    %c0_0 = arith.constant 0 : index
    %0 = vector.load %arg1[%c0, %c0_0] : memref<8x128xf32, #tpu.memory_space<vmem>>, vector<8x128xf32>
    %c0_1 = arith.constant 0 : index
    %c0_2 = arith.constant 0 : index
    %1 = vector.load %arg2[%c0_1, %c0_2] : memref<128x256xf32, #tpu.memory_space<vmem>>, vector<128x256xf32>
    %cst = arith.constant dense<0.000000e+00> : vector<8x256xf32>
    %2 = tpu.matmul %0, %1, %cst {dimension_numbers = #tpu.dot_dimension_numbers<[1], [0], [0], [1], [0, 0, 1, 1], [], []>} : vector<8x128xf32>, vector<128x256xf32>, vector<8x256xf32> -> vector<8x256xf32>
    %c0_3 = arith.constant 0 : index
    %c0_4 = arith.constant 0 : index
    %3 = vector.load %arg3[%c0_3, %c0_4] : memref<1x256xf32, #tpu.memory_space<vmem>>, vector<1x256xf32>
    %4 = vector.broadcast %3 : vector<1x256xf32> to vector<8x256xf32>
    %5 = arith.addf %2, %4 : vector<8x256xf32>
    %c0_5 = arith.constant 0 : index
    %c0_6 = arith.constant 0 : index
    %6 = vector.load %arg4[%c0_5, %c0_6] : memref<8x256xf32, #tpu.memory_space<vmem>>, vector<8x256xf32>
    tpu.vector_store %arg4[%c0_5, %c0_6], %5 {strides = array<i32>} : memref<8x256xf32, #tpu.memory_space<vmem>>, vector<8x256xf32>,
    return
  }
  func.func @transform_0(%arg0: i32) -> (i32, i32) {
    %c0_i32 = arith.constant 0 : i32
    %c0_i32_0 = arith.constant 0 : i32
    return %arg0, %c0_i32 : i32, i32
  }
  func.func @transform_1(%arg0: i32) -> (i32, i32) {
    %c0_i32 = arith.constant 0 : i32
    %c0_i32_0 = arith.constant 0 : i32
    %c0_i32_1 = arith.constant 0 : i32
    return %c0_i32, %c0_i32_0 : i32, i32
  }
  func.func @transform_2(%arg0: i32) -> (i32, i32) {
    %c0_i32 = arith.constant 0 : i32
    %c0_i32_0 = arith.constant 0 : i32
    %c0_i32_1 = arith.constant 0 : i32
    return %c0_i32, %c0_i32_0 : i32, i32
  }
  func.func @transform_3(%arg0: i32) -> (i32, i32) {
    %c0_i32 = arith.constant 0 : i32
    %c0_i32_0 = arith.constant 0 : i32
    return %arg0, %c0_i32 : i32, i32
  }
}

</mosaic_0001>

<llo_original>
// kernel: tpu_custom_call.1
$region0: #{tpu_custom_call.1}
  #allocation0 [shape = 'u32[]', space=smem, size = 0x4, offset = 0x4, fixed_abs, tag = 'smem constant byte address 0x4 - core index']
  #allocation1 [shape = 'u32[144,128]{1,0:T(1,128)}', space=vmem, size = 0x12000, scoped, tag = 'internal scratch']
  %s0 = inlined_call_operand.hbm [shape: f32[8,128], index: 0, kind: input, shape index: {}]
  %s1 = inlined_call_operand.hbm [shape: f32[128,256], index: 1, kind: input, shape index: {}]
  %s2 = inlined_call_operand.vmem [shape: f32[1,256], index: 2, kind: input, shape index: {}]
  %s3 = inlined_call_operand.hbm [shape: f32[8,256], index: 3, kind: output, shape index: {}]
  %s4 = sld [smem:[#allocation0]]
  $region30: #{tpu_custom_call.1} parent=0
    _
  %s6 = ssub.s32 1, %s4
  %s7 = scalar_select 0, %s6, %s4
  $region1: #{tpu_custom_call.1} parent=0
    #allocation2 [shape = 'u8[4096]{0}', space=vmem, size = 0x1000, scoped, tag = 'input window, operand 0, single buffered']
    #allocation3 [shape = 's32[1]{0}', space=sflag, size = 0x4, scoped, tag = 'scoped memory for tpu_custom_call.1']
    #allocation4 [shape = 's32[1]{0}', space=sflag, size = 0x4, scoped, tag = 'scoped memory for tpu_custom_call.1']
    #allocation5 [shape = 'u8[131072]{0}', space=vmem, size = 0x20000, scoped, tag = 'input window, operand 1, single buffered']
    #allocation6 [shape = 's32[1]{0}', space=sflag, size = 0x4, scoped, tag = 'scoped memory for tpu_custom_call.1']
    #allocation7 [shape = 'u8[8192]{0}', space=vmem, size = 0x2000, scoped, tag = 'output window, operand 0, single buffered']
    %8 = vsyncpa [#allocation3], 0
    %9 = vsyncpa [#allocation6], 0
    %10 = vsyncpa [#allocation4], 0
    // Predicated region
    $region2: #{tpu_custom_call.1} parent=1 // pred_check
      _
    $region3: #{tpu_custom_call.1} parent=1 // pred_check_branch
      %12 = sbr.rel (0) target = $region5
    $region4: #{tpu_custom_call.1} parent=1 // pred_region
      %s14 = ssub.s32 128, 128
      %15 = vsyncadd [#allocation3], %s14
      %s17 = sshll.u32 [#allocation2], 4
      %s18 = int_to_ptr.vmem [resolvable:$true] %s17
      %20 = dma.hbm_to_vmem [thread:$0]  %s0, 128, %s18, [#allocation3]
    $region5: #{tpu_custom_call.1} parent=1 // pred_fallthru
      _
    // Predicated region
    $region6: #{tpu_custom_call.1} parent=1 // pred_check
      _
    $region7: #{tpu_custom_call.1} parent=1 // pred_check_branch
      %22 = sbr.rel (0) target = $region9
    $region8: #{tpu_custom_call.1} parent=1 // pred_region
      %s24 = ssub.s32 4096, 4096
      %25 = vsyncadd [#allocation6], %s24
      %s26 = sshll.u32 [#allocation5], 4
      %s27 = int_to_ptr.vmem [resolvable:$true] %s26
      %32 = dma.hbm_to_vmem [thread:$0]  %s1, 4096, %s27, [#allocation6], 256, 256, 16
    $region9: #{tpu_custom_call.1} parent=1 // pred_fallthru
      _
    // Predicated region
    $region10: #{tpu_custom_call.1} parent=1 // pred_check
      _
    $region11: #{tpu_custom_call.1} parent=1 // pred_check_branch
      %34 = sbr.rel (0) target = $region13
    $region12: #{tpu_custom_call.1} parent=1 // pred_region
      _
    $region13: #{tpu_custom_call.1} parent=1 // pred_fallthru
      _
    // Predicated region
    $region14: #{tpu_custom_call.1} parent=1 // pred_check
      _
    $region15: #{tpu_custom_call.1} parent=1 // pred_check_branch
      %36 = sbr.rel (0) target = $region17
    $region16: #{tpu_custom_call.1} parent=1 // pred_region
      %37 = dma.done [#allocation3], 128
    $region17: #{tpu_custom_call.1} parent=1 // pred_fallthru
      _
    // Predicated region
    $region18: #{tpu_custom_call.1} parent=1 // pred_check
      _
    $region19: #{tpu_custom_call.1} parent=1 // pred_check_branch
      %39 = sbr.rel (0) target = $region21
    $region20: #{tpu_custom_call.1} parent=1 // pred_region
      %40 = dma.done [#allocation6], 4096
    $region21: #{tpu_custom_call.1} parent=1 // pred_fallthru
      _
    %v41 = vld [vmem:[#allocation2] sm:$0xff]
    %v42 = vld [vmem:[#allocation5] sm:$0xff]
    %v43 = vld [vmem:[#allocation5 + $0x8] sm:$0xff]
    %v44 = vld [vmem:[#allocation5 + $0x10] sm:$0xff]
    %v45 = vld [vmem:[#allocation5 + $0x18] sm:$0xff]
    %v46 = vld [vmem:[#allocation5 + $0x20] sm:$0xff]
    %v47 = vld [vmem:[#allocation5 + $0x28] sm:$0xff]
    %v48 = vld [vmem:[#allocation5 + $0x30] sm:$0xff]
    %v49 = vld [vmem:[#allocation5 + $0x38] sm:$0xff]
    %v50 = vld [vmem:[#allocation5 + $0x40] sm:$0xff]
    %v51 = vld [vmem:[#allocation5 + $0x48] sm:$0xff]
    %v52 = vld [vmem:[#allocation5 + $0x50] sm:$0xff]
    %v53 = vld [vmem:[#allocation5 + $0x58] sm:$0xff]
    %v54 = vld [vmem:[#allocation5 + $0x60] sm:$0xff]
    %v55 = vld [vmem:[#allocation5 + $0x68] sm:$0xff]
    %v56 = vld [vmem:[#allocation5 + $0x70] sm:$0xff]
    %v57 = vld [vmem:[#allocation5 + $0x78] sm:$0xff]
    %v58 = vld [vmem:[#allocation5 + $0x80] sm:$0xff]
    %v59 = vld [vmem:[#allocation5 + $0x88] sm:$0xff]
    %v60 = vld [vmem:[#allocation5 + $0x90] sm:$0xff]
    %v61 = vld [vmem:[#allocation5 + $0x98] sm:$0xff]
    %v62 = vld [vmem:[#allocation5 + $0xa0] sm:$0xff]
    %v63 = vld [vmem:[#allocation5 + $0xa8] sm:$0xff]
    %v64 = vld [vmem:[#allocation5 + $0xb0] sm:$0xff]
    %v65 = vld [vmem:[#allocation5 + $0xb8] sm:$0xff]
    %v66 = vld [vmem:[#allocation5 + $0xc0] sm:$0xff]
    %v67 = vld [vmem:[#allocation5 + $0xc8] sm:$0xff]
    %v68 = vld [vmem:[#allocation5 + $0xd0] sm:$0xff]
    %v69 = vld [vmem:[#allocation5 + $0xd8] sm:$0xff]
    %v70 = vld [vmem:[#allocation5 + $0xe0] sm:$0xff]
    %v71 = vld [vmem:[#allocation5 + $0xe8] sm:$0xff]
    %v72 = vld [vmem:[#allocation5 + $0xf0] sm:$0xff]
    %v73 = vld [vmem:[#allocation5 + $0xf8] sm:$0xff]
    %v74 = vld [vmem:[%s2] sm:$0x3]
    %v76 = vlaneseq
    %v77 = vshrl.u32 %v76, 7
    %v78 = vsub.s32 0, %v77
    %v79 = vrot.slane %v74, %v78
    %v80 = vlaneseq
    %v81 = vshrl.u32 %v80, 7
    %v82 = vsub.s32 1, %v81
    %v83 = vrot.slane %v74, %v82
    %86 = vmatprep.subr.mxu0 %v73
    %87 = vmatpush1.msra.mxu0 %v72
    %88 = vmatprep.subr.mxu0 %v71
    %89 = vmatpush1.msra.mxu0 %v70
    %90 = vmatprep.subr.mxu0 %v69
    %91 = vmatpush1.msra.mxu0 %v68
    %92 = vmatprep.subr.mxu0 %v67
    %93 = vmatpush1.msra.mxu0 %v66
    %94 = vmatprep.subr.mxu0 %v65
    %95 = vmatpush1.msra.mxu0 %v64
    %96 = vmatprep.subr.mxu0 %v63
    %97 = vmatpush1.msra.mxu0 %v62
    %98 = vmatprep.subr.mxu0 %v61
    %99 = vmatpush1.msra.mxu0 %v60
    %100 = vmatprep.subr.mxu0 %v59
    %101 = vmatpush1.msra.mxu0 %v58
    %102 = vmatprep.subr.mxu0 %v57
    %103 = vmatpush1.msra.mxu0 %v56
    %104 = vmatprep.subr.mxu0 %v55
    %105 = vmatpush1.msra.mxu0 %v54
    %106 = vmatprep.subr.mxu0 %v53
    %107 = vmatpush1.msra.mxu0 %v52
    %108 = vmatprep.subr.mxu0 %v51
    %109 = vmatpush1.msra.mxu0 %v50
    %110 = vmatprep.subr.mxu0 %v49
    %111 = vmatpush1.msra.mxu0 %v48
    %112 = vmatprep.subr.mxu0 %v47
    %113 = vmatpush1.msra.mxu0 %v46
    %114 = vmatprep.subr.mxu0 %v45
    %115 = vmatpush1.msra.mxu0 %v44
    %116 = vmatprep.subr.mxu0 %v43
    %117 = vmatpush1.msra.mxu0 %v42
    %118 = vmatprep.subr.mxu0 0.0
    %119 = vmatpush2.msra.mxu0 0.0
    %120 = vmatprep.subr.mxu0 0.0
    %121 = vmatpush2.msra.mxu0 0.0
    %122 = vmatprep.subr.mxu0 0.0
    %123 = vmatpush2.msra.mxu0 0.0
    %124 = vmatprep.subr.mxu0 0.0
    %125 = vmatpush2.msra.mxu0 0.0
    %126 = vmatprep.subr.mxu0 0.0
    %127 = vmatpush2.msra.mxu0 0.0
    %128 = vmatprep.subr.mxu0 0.0
    %129 = vmatpush2.msra.mxu0 0.0
    %130 = vmatprep.subr.mxu0 0.0
    %131 = vmatpush2.msra.mxu0 0.0
    %132 = vmatprep.subr.mxu0 0.0
    %133 = vmatpush2.msra.mxu0 0.0
    %134 = vmatprep.subr.mxu0 0.0
    %135 = vmatpush2.msra.mxu0 0.0
    %136 = vmatprep.subr.mxu0 0.0
    %137 = vmatpush2.msra.mxu0 0.0
    %138 = vmatprep.subr.mxu0 0.0
    %139 = vmatpush2.msra.mxu0 0.0
    %140 = vmatprep.subr.mxu0 0.0
    %141 = vmatpush2.msra.mxu0 0.0
    %142 = vmatprep.subr.mxu0 0.0
    %143 = vmatpush2.msra.mxu0 0.0
    %144 = vmatprep.subr.mxu0 0.0
    %145 = vmatpush2.msra.mxu0 0.0
    %146 = vmatprep.subr.mxu0 0.0
    %147 = vmatpush2.msra.mxu0 0.0
    %148 = vmatprep.subr.mxu0 0.0
    %149 = vmatpush2.msra.mxu0 0.0
    %150 = vmatprep.mubr.f32.mxu0 0.0
    %151 = vmatmul.mubr.f32.gmra.mxu0 %v41
    %v152 = vpop.f32.mrf.mxu0
    %v153 = vadd.f32 %v79, %v152
    %v154 = vpop.f32.mrf.mxu0
    %v155 = vadd.f32 %v83, %v154
    %156 = vdwg.mxu0
    %157 = vst [vmem:[#allocation7] sm:$0xff] %v153
    %158 = vst [vmem:[#allocation7 + $0x8] sm:$0xff] %v155
    // Predicated region
    $region22: #{tpu_custom_call.1} parent=1 // pred_check
      _
    $region23: #{tpu_custom_call.1} parent=1 // pred_check_branch
      %160 = sbr.rel (0) target = $region25
    $region24: #{tpu_custom_call.1} parent=1 // pred_region
      %s162 = ssub.s32 256, 256
      %163 = vsyncadd [#allocation4], %s162
      %s165 = sshll.u32 [#allocation7], 4
      %s166 = int_to_ptr.vmem [resolvable:$true] %s165
      %168 = dma.vmem_to_hbm [thread:$0]  %s166, 256, %s3, [#allocation4]
    $region25: #{tpu_custom_call.1} parent=1 // pred_fallthru
      _
    // Predicated region
    $region26: #{tpu_custom_call.1} parent=1 // pred_check
      _
    $region27: #{tpu_custom_call.1} parent=1 // pred_check_branch
      %170 = sbr.rel (0) target = $region29
    $region28: #{tpu_custom_call.1} parent=1 // pred_region
      %171 = dma.done [#allocation4], 256
    $region29: #{tpu_custom_call.1} parent=1 // pred_fallthru
      _
    %172 = vsyncpa [#allocation3], 1
    %173 = vsyncpa [#allocation6], 1
    %174 = vsyncpa [#allocation4], 1

</llo_original>
